<compile_context>
chip_gen: v7x
topology: tpu7x:2x2x1
jax: 0.10.0
libtpu: 0.0.40
codegen_flags: <defaults>
</compile_context>

<pallas_src>
import jax
import jax.numpy as jnp
from jax import lax
from jax.experimental import pallas as pl
from jax.experimental.pallas import tpu as pltpu


# ----------------------------------------------------------------------------
# small static helpers
# ----------------------------------------------------------------------------
def _same_pad(k):
    total = k - 1
    left = total // 2
    return left, total - left


def _round_up(n, m):
    return ((n + m - 1) // m) * m


def _seg_size(S, pool, K_band):
    """Per-sample lane segment: 128-aligned and big enough that every lane
    shift used by the two folded convolutions stays inside the sample's own
    segment (or only touches provably-zero lanes)."""
    L = (S - pool) // pool + 1
    pad_l, _ = _same_pad(K_band)
    need = max(S + K_band - 1,                         # conv-1 window
               pool * (L + K_band - 2 - pad_l) + 1,    # conv-2 right reach
               pool * (L + pad_l))                     # conv-2 left reach
    return _round_up(need, 128)


def _choose_block(n, seg, rows, budget_bytes=4 << 20, max_blk=8):
    """Samples per grid step: a divisor of n, capped so the widest in-kernel
    temporaries (rows x (blk*seg) f32) stay within a conservative VMEM budget."""
    cap = max(1, min(max_blk, budget_bytes // max(1, rows * seg * 4)))
    for d in range(min(n, cap), 0, -1):
        if n % d == 0:
            return d
    return 1


def _shift_left(a, k):
    """a[:, j] <- a[:, j + k], zero fill on the right."""
    if k == 0:
        return a
    z = jnp.zeros((a.shape[0], k), a.dtype)
    return jnp.concatenate([a[:, k:], z], axis=1)


def _shift_right(a, k):
    """a[:, j] <- a[:, j - k], zero fill on the left."""
    if k == 0:
        return a
    z = jnp.zeros((a.shape[0], k), a.dtype)
    return jnp.concatenate([z, a[:, :-k]], axis=1)


# ----------------------------------------------------------------------------
# wrapper-side plumbing (tiny one-off plain-JAX work)
# ----------------------------------------------------------------------------
def _fold_weights(bw, sw, t1w, t2w, bn, *, pool, K_band):
    """Fold band conv + spatial conv + strided temporal conv-1 + eval-mode BN
    scale into one (F, U*C) weight; fold temporal conv-2 into one (F, K*F)."""
    F_, _, C = sw.shape
    bn_gamma, bn_beta, bn_mean, bn_var = bn
    inv_std = 1.0 / jnp.sqrt(bn_var + 1e-5)
    bn_scale = bn_gamma * inv_std                                  # (F,)
    bn_shift = (bn_beta - bn_mean * bn_scale)[:, None]             # (F, 1)

    U = K_band + pool - 1
    Wk = jnp.einsum("fnc,nk->kfc", sw, bw)                         # (K, F, C)
    T1 = jnp.transpose(t1w, (2, 0, 1))                             # (pool, F, F)
    M = jnp.zeros((U, F_, C), jnp.float32)
    for t in range(pool):                                          # M_u = sum T1_t @ Wk_k
        for k in range(K_band):
            M = M.at[t + k].add(T1[t] @ Wk[k])
    M = M * bn_scale[None, :, None]                                # fold BN scale
    Mcomb = jnp.transpose(M, (1, 0, 2)).reshape(F_, U * C)         # (F, U*C)
    T2comb = jnp.transpose(t2w, (0, 2, 1)).reshape(F_, K_band * F_)  # (F, K*F)
    return Mcomb, bn_shift, T2comb


def _to_lane_segments(x, SEG, pad_l):
    """(N, C, S) -> (C, N*SEG): each sample occupies one 128-aligned lane
    segment with the data at lanes [pad_l, pad_l+S) and zeros elsewhere."""
    N, C, S = x.shape
    xp = jnp.zeros((N, C, SEG), jnp.float32)
    xp = xp.at[:, :, pad_l:pad_l + S].set(x.astype(jnp.float32))
    return jnp.transpose(xp, (1, 0, 2)).reshape(C, N * SEG)


# ----------------------------------------------------------------------------
# in-kernel folded conv stack (shared by both kernels)
# ----------------------------------------------------------------------------
def _conv_stack(xw, m, shift, t2, *, SEG, W, pool, L, U, K_band, pad_l):
    """xw: (C, W) padded input lanes -> (F, W) dilated features
    (value l at lane pool*l within each SEG segment, all other lanes zero)."""
    # band + spatial + strided temporal conv-1 + BN scale -> one MXU matmul
    xwin = jnp.concatenate([_shift_left(xw, u) for u in range(U)], axis=0)
    z = jnp.dot(m, xwin, preferred_element_type=jnp.float32)       # (F, W)
    z = jnp.tanh(z + shift)                                        # BN shift + tanh

    # keep only the valid dilated positions so conv-2's "same" padding reads
    # exact zeros across pool / segment boundaries
    lane = lax.broadcasted_iota(jnp.int32, (1, W), 1) % SEG
    valid = jnp.logical_and(lane % pool == 0, lane < pool * L)     # (1, W)
    z = jnp.where(valid, z, 0.0)

    # temporal conv-2 ("same"): taps are `pool` lanes apart -> one MXU matmul
    taps = []
    for k in range(K_band):
        off = pool * (k - pad_l)
        taps.append(_shift_left(z, off) if off >= 0 else _shift_right(z, -off))
    zwin = jnp.concatenate(taps, axis=0)                           # (K*F, W)
    out = jnp.dot(t2, zwin, preferred_element_type=jnp.float32)    # (F, W)

    # zero junk lanes so downstream lane reductions only see valid values
    return jnp.where(valid, out, 0.0)


# ----------------------------------------------------------------------------
# Kernel 1: template feature extractor (run once at precompute time)
# ----------------------------------------------------------------------------
def make_feature_kernel(*, SEG, Nblk, pool, L, U, K_band):
    W = Nblk * SEG
    pad_l, _ = _same_pad(K_band)

    def kernel(x_ref, m_ref, shift_ref, t2_ref, out_ref):
        out_ref[...] = _conv_stack(x_ref[...], m_ref[...], shift_ref[...],
                                   t2_ref[...], SEG=SEG, W=W, pool=pool, L=L,
                                   U=U, K_band=K_band, pad_l=pad_l)

    return kernel


def feature_extractor(x, bw, sw, t1w, t2w, bn, *, pool, K_band):
    """x: (N, C, S) -> (N, F, SEG) dilated features (used for the templates)."""
    N, C, S = x.shape
    F_ = sw.shape[0]
    L = (S - pool) // pool + 1
    pad_l, _ = _same_pad(K_band)
    U = K_band + pool - 1
    SEG = _seg_size(S, pool, K_band)
    rows = C + U * C + (K_band + 2) * F_
    Nblk = _choose_block(N, SEG, rows)

    Mcomb, bn_shift, T2comb = _fold_weights(bw, sw, t1w, t2w, bn,
                                            pool=pool, K_band=K_band)
    x2d = _to_lane_segments(x, SEG, pad_l)

    kernel = make_feature_kernel(SEG=SEG, Nblk=Nblk, pool=pool, L=L, U=U,
                                 K_band=K_band)

    flops = 2 * N * SEG * (F_ * U * C + F_ * K_band * F_)
    cost = pl.CostEstimate(
        flops=int(flops), transcendentals=int(N * SEG * F_),
        bytes_accessed=int(4 * ((C + F_) * N * SEG
                                + F_ * (U * C + K_band * F_ + 1))))

    out2d = pl.pallas_call(
        kernel,
        out_shape=jax.ShapeDtypeStruct((F_, N * SEG), jnp.float32),
        grid=(N // Nblk,),
        in_specs=[
            pl.BlockSpec((C, Nblk * SEG), lambda i: (0, i)),
            pl.BlockSpec(Mcomb.shape, lambda i: (0, 0)),
            pl.BlockSpec(bn_shift.shape, lambda i: (0, 0)),
            pl.BlockSpec(T2comb.shape, lambda i: (0, 0)),
        ],
        out_specs=pl.BlockSpec((F_, Nblk * SEG), lambda i: (0, i)),
        compiler_params=pltpu.CompilerParams(
            dimension_semantics=("parallel",)),
        cost_estimate=cost,
    )(x2d, Mcomb, bn_shift, T2comb)

    # (F, N*SEG) -> (N, F, SEG): cheap XLA layout plumbing, done once.
    return jnp.transpose(out2d.reshape(F_, N, SEG), (1, 0, 2))


def precompute_template_features(params, *, pool, K_band, eps=1e-8):
    """Feature-extract the (constant) reference templates once and
    pre-normalize per (class, feature) for the cosine similarity."""
    tfeat = feature_extractor(params["templates"], *params["Yf"],
                              pool=pool, K_band=K_band)
    tnorm = jnp.sqrt(jnp.sum(tfeat * tfeat, axis=-1, keepdims=True))
    return tfeat / jnp.maximum(tnorm, eps)


# ----------------------------------------------------------------------------
# Kernel 2: fused forward (instance-norm + conv stack + cosine + fc)
# ----------------------------------------------------------------------------
def make_fused_kernel(*, C, S, SEG, Nblk, pool, L, U, K_band, Kc, F,
                      eps, in_eps=1e-5):
    W = Nblk * SEG
    pad_l, _ = _same_pad(K_band)
    inv_cnt = 1.0 / float(C * S)

    def kernel(x_ref, m_ref, shift_ref, t2_ref, that_ref, fcw_ref, fcb_ref,
               out_ref):
        xw = x_ref[...]                                            # (C, W)

        # ---- nn.InstanceNorm2d(1): per-sample stats over (C, S) ----
        s1 = jnp.sum(xw, axis=0, keepdims=True)                    # (1, W)
        s2 = jnp.sum(xw * xw, axis=0, keepdims=True)
        mu_parts, inv_parts = [], []
        for n in range(Nblk):                                      # 128-aligned slices
            tot = jnp.sum(s1[:, n * SEG:(n + 1) * SEG], keepdims=True)
            tot2 = jnp.sum(s2[:, n * SEG:(n + 1) * SEG], keepdims=True)
            mu = tot * inv_cnt
            var = tot2 * inv_cnt - mu * mu                         # biased var
            inv = lax.rsqrt(var + in_eps)
            mu_parts.append(jnp.broadcast_to(mu, (1, SEG)))
            inv_parts.append(jnp.broadcast_to(inv, (1, SEG)))
        mu_l = jnp.concatenate(mu_parts, axis=1)                   # (1, W)
        inv_l = jnp.concatenate(inv_parts, axis=1)
        lane = lax.broadcasted_iota(jnp.int32, (1, W), 1) % SEG
        in_valid = jnp.logical_and(lane >= pad_l, lane < pad_l + S)
        # normalize; conv padding lanes must stay exactly zero
        xw = jnp.where(in_valid, (xw - mu_l) * inv_l, 0.0)

        # ---- folded conv stack (2 MXU matmuls) -> dilated features ----
        feat = _conv_stack(xw, m_ref[...], shift_ref[...], t2_ref[...],
                           SEG=SEG, W=W, pool=pool, L=L, U=U, K_band=K_band,
                           pad_l=pad_l)                            # (F, W)

        # ---- cosine similarity vs pre-normalized templates + Linear ----
        that = that_ref[...]                                       # (Kc, F, SEG)
        lane_n = lax.broadcasted_iota(jnp.int32, (1, Nblk), 1)
        cos_cols = jnp.zeros((Kc * F, Nblk), jnp.float32)          # row k*F+f, col n
        for n in range(Nblk):
            seg = feat[:, n * SEG:(n + 1) * SEG]                   # (F, SEG)
            xsq = jnp.sum(seg * seg, axis=-1, keepdims=True)       # (F, 1)
            xhat = seg * (1.0 / jnp.maximum(jnp.sqrt(xsq), eps))   # clamp_min(eps)
            col = jnp.concatenate(
                [jnp.sum(xhat * that[k], axis=-1, keepdims=True)
                 for k in range(Kc)], axis=0)                      # (Kc*F, 1)
            cos_cols = cos_cols + jnp.where(lane_n == n, col, 0.0)

        logits = jnp.dot(fcw_ref[...], cos_cols,
                         preferred_element_type=jnp.float32)       # (NCp, Nblk)
        out_ref[...] = (logits + fcb_ref[...])[None]               # (1, NCp, Nblk)

    return kernel


def ftn_forward(X, params, tfeat_hat, *, pool, K_band, eps=1e-8):
    """X: (N, C, S) -> logits (N, n_classes).  nn.Dropout is identity in eval."""
    N, C, S = X.shape
    bw, sw, t1w, t2w, bn = params["X"]
    F_ = sw.shape[0]
    Kc, _, SEGt = tfeat_hat.shape
    NC = params["fc_b"].shape[0]

    L = (S - pool) // pool + 1
    pad_l, _ = _same_pad(K_band)
    U = K_band + pool - 1
    SEG = _seg_size(S, pool, K_band)
    assert SEG == SEGt, "template features were precomputed for a different S"
    rows = C + U * C + (K_band + 2) * F_
    Nblk = _choose_block(N, SEG, rows)
    G = N // Nblk

    Mcomb, bn_shift, T2comb = _fold_weights(bw, sw, t1w, t2w, bn,
                                            pool=pool, K_band=K_band)
    x2d = _to_lane_segments(X, SEG, pad_l)

    NCp = _round_up(NC, 128)                                       # lane-dense matmul/store
    fcw_p = jnp.zeros((NCp, Kc * F_), jnp.float32).at[:NC, :].set(
        params["fc_w"].astype(jnp.float32))
    fcb_p = jnp.zeros((NCp, 1), jnp.float32).at[:NC, 0].set(
        params["fc_b"].astype(jnp.float32))

    kernel = make_fused_kernel(C=C, S=S, SEG=SEG, Nblk=Nblk, pool=pool, L=L,
                               U=U, K_band=K_band, Kc=Kc, F=F_, eps=eps)

    flops = (2 * N * SEG * (F_ * U * C + F_ * K_band * F_)
             + 2 * N * Kc * F_ * SEG + 2 * N * NCp * Kc * F_)
    cost = pl.CostEstimate(
        flops=int(flops),
        transcendentals=int(N * SEG * F_ + 2 * N * F_),
        bytes_accessed=int(4 * (C * N * SEG + N * NCp + Kc * F_ * SEG
                                + F_ * (U * C + K_band * F_ + 1)
                                + NCp * (Kc * F_ + 1))))

    out3 = pl.pallas_call(
        kernel,
        out_shape=jax.ShapeDtypeStruct((G, NCp, Nblk), jnp.float32),
        grid=(G,),
        in_specs=[
            pl.BlockSpec((C, Nblk * SEG), lambda i: (0, i)),
            pl.BlockSpec(Mcomb.shape, lambda i: (0, 0)),
            pl.BlockSpec(bn_shift.shape, lambda i: (0, 0)),
            pl.BlockSpec(T2comb.shape, lambda i: (0, 0)),
            pl.BlockSpec(tfeat_hat.shape, lambda i: (0, 0, 0)),
            pl.BlockSpec(fcw_p.shape, lambda i: (0, 0)),
            pl.BlockSpec(fcb_p.shape, lambda i: (0, 0)),
        ],
        out_specs=pl.BlockSpec((1, NCp, Nblk), lambda i: (i, 0, 0)),
        compiler_params=pltpu.CompilerParams(
            dimension_semantics=("parallel",)),
        cost_estimate=cost,
    )(x2d, Mcomb, bn_shift, T2comb, tfeat_hat, fcw_p, fcb_p)

    # (G, NCp, Nblk) -> (N, NC): tiny XLA layout plumbing.
    return jnp.transpose(out3, (0, 2, 1)).reshape(N, NCp)[:, :NC]


# ----------------------------------------------------------------------------
# demo / smoke test
# ----------------------------------------------------------------------------
if __name__ == "__main__":
    # small, shape-consistent config
    n_bands, n_features = 4, 8
    n_channels, n_samples = 8, 64
    n_classes = 4
    band_kernel, pooling_kernel = 9, 2
    T_ch = 8                      # template "channels" (harmonic sin/cos pairs)
    B = 2

    key = jax.random.PRNGKey(0)
    ks = jax.random.split(key, 12)

    def init(k, shape, scale=0.1):
        return scale * jax.random.normal(k, shape, jnp.float32)

    def bn_init(F):
        return (jnp.ones((F,), jnp.float32), jnp.zeros((F,), jnp.float32),
                jnp.zeros((F,), jnp.float32), jnp.ones((F,), jnp.float32))

    # feature_extractor_X weights
    x_bw = init(ks[0], (n_bands, band_kernel))
    x_sw = init(ks[1], (n_features, n_bands, n_channels))
    x_t1 = init(ks[2], (n_features, n_features, pooling_kernel))
    x_t2 = init(ks[3], (n_features, n_features, band_kernel))
    # feature_extractor_Yf weights
    y_bw = init(ks[4], (n_bands, band_kernel))
    y_sw = init(ks[5], (n_features, n_bands, T_ch))
    y_t1 = init(ks[6], (n_features, n_features, pooling_kernel))
    y_t2 = init(ks[7], (n_features, n_features, band_kernel))
    # fc layer
    fc_w = init(ks[8], (n_classes, n_classes * n_features))
    fc_b = init(ks[9], (n_classes,))

    # deterministic sinusoidal reference templates (n_classes, T_ch, S)
    t = jnp.arange(n_samples, dtype=jnp.float32) / 250.0
    freqs = jnp.array([8.0, 10.0, 12.0, 15.0], jnp.float32)
    templ = []
    for c in range(n_classes):
        rows = []
        for h in range(T_ch // 2):
            rows.append(jnp.sin(2 * jnp.pi * (h + 1) * freqs[c] * t))
            rows.append(jnp.cos(2 * jnp.pi * (h + 1) * freqs[c] * t))
        templ.append(jnp.stack(rows))
    templates = jnp.stack(templ).astype(jnp.float32)

    params = {
        "X": (x_bw, x_sw, x_t1, x_t2, bn_init(n_features)),
        "Yf": (y_bw, y_sw, y_t1, y_t2, bn_init(n_features)),
        "templates": templates,
        "fc_w": fc_w,
        "fc_b": fc_b,
    }

    X = jax.random.normal(ks[10], (B, n_channels, n_samples), jnp.float32)

    # Constant work hoisted out of the per-forward path.
    tfeat_hat = jax.block_until_ready(
        precompute_template_features(params, pool=pooling_kernel,
                                     K_band=band_kernel))

    fwd = jax.jit(lambda x, tf: ftn_forward(x, params, tf, pool=pooling_kernel,
                                            K_band=band_kernel))
    out = jax.block_until_ready(fwd(X, tfeat_hat))

    assert out.shape == (B, n_classes)
    assert bool(jnp.all(jnp.isfinite(out)))
    print("KERNEL_OK")
</pallas_src>

<mosaic_0001>
module attributes {stable_mosaic.version = 11 : i64} {
  func.func @kernel(%arg0: i32, %arg1: memref<8x512xf32, #tpu.memory_space<vmem>>, %arg2: memref<8x80xf32, #tpu.memory_space<vmem>>, %arg3: memref<8x1xf32, #tpu.memory_space<vmem>>, %arg4: memref<8x72xf32, #tpu.memory_space<vmem>>, %arg5: memref<8x512xf32, #tpu.memory_space<vmem>>) attributes {dimension_semantics = [#tpu.dimension_semantics<parallel>], iteration_bounds = array<i64: 1>, scalar_prefetch = 0 : i64, scratch_operands = 0 : i64, tpu.core_type = #tpu.core_type<tc>, window_params = [{transform_indices = @transform_0, window_bounds = array<i64: 8, 512>}, {pipeline_mode = #tpu.pipeline_mode<synchronous>, transform_indices = @transform_1, window_bounds = array<i64: 8, 80>}, {pipeline_mode = #tpu.pipeline_mode<synchronous>, transform_indices = @transform_2, window_bounds = array<i64: 8, 1>}, {pipeline_mode = #tpu.pipeline_mode<synchronous>, transform_indices = @transform_3, window_bounds = array<i64: 8, 72>}, {transform_indices = @transform_4, window_bounds = array<i64: 8, 512>}]} {
    %c0 = arith.constant 0 : index
    %c0_0 = arith.constant 0 : index
    %0 = vector.load %arg1[%c0, %c0_0] : memref<8x512xf32, #tpu.memory_space<vmem>>, vector<8x512xf32>
    %c0_1 = arith.constant 0 : index
    %c0_2 = arith.constant 0 : index
    %1 = vector.load %arg2[%c0_1, %c0_2] : memref<8x80xf32, #tpu.memory_space<vmem>>, vector<8x80xf32>
    %c0_3 = arith.constant 0 : index
    %c0_4 = arith.constant 0 : index
    %2 = vector.load %arg3[%c0_3, %c0_4] : memref<8x1xf32, #tpu.memory_space<vmem>>, vector<8x1xf32>
    %c0_5 = arith.constant 0 : index
    %c0_6 = arith.constant 0 : index
    %3 = vector.load %arg4[%c0_5, %c0_6] : memref<8x72xf32, #tpu.memory_space<vmem>>, vector<8x72xf32>
    %cst = arith.constant 0.000000e+00 : f32
    %4 = vector.broadcast %cst : f32 to vector<8x1xf32>
    %5 = vector.extract_strided_slice %0 {offsets = [0, 1], sizes = [8, 511], strides = [1, 1]} : vector<8x512xf32> to vector<8x511xf32>
    %6 = tpu.concatenate %5, %4 in 1 : vector<8x511xf32>, vector<8x1xf32> -> vector<8x512xf32>
    %cst_7 = arith.constant 0.000000e+00 : f32
    %7 = vector.broadcast %cst_7 : f32 to vector<8x2xf32>
    %8 = vector.extract_strided_slice %0 {offsets = [0, 2], sizes = [8, 510], strides = [1, 1]} : vector<8x512xf32> to vector<8x510xf32>
    %9 = tpu.concatenate %8, %7 in 1 : vector<8x510xf32>, vector<8x2xf32> -> vector<8x512xf32>
    %cst_8 = arith.constant 0.000000e+00 : f32
    %10 = vector.broadcast %cst_8 : f32 to vector<8x3xf32>
    %11 = vector.extract_strided_slice %0 {offsets = [0, 3], sizes = [8, 509], strides = [1, 1]} : vector<8x512xf32> to vector<8x509xf32>
    %12 = tpu.concatenate %11, %10 in 1 : vector<8x509xf32>, vector<8x3xf32> -> vector<8x512xf32>
    %cst_9 = arith.constant 0.000000e+00 : f32
    %13 = vector.broadcast %cst_9 : f32 to vector<8x4xf32>
    %14 = vector.extract_strided_slice %0 {offsets = [0, 4], sizes = [8, 508], strides = [1, 1]} : vector<8x512xf32> to vector<8x508xf32>
    %15 = tpu.concatenate %14, %13 in 1 : vector<8x508xf32>, vector<8x4xf32> -> vector<8x512xf32>
    %cst_10 = arith.constant 0.000000e+00 : f32
    %16 = vector.broadcast %cst_10 : f32 to vector<8x5xf32>
    %17 = vector.extract_strided_slice %0 {offsets = [0, 5], sizes = [8, 507], strides = [1, 1]} : vector<8x512xf32> to vector<8x507xf32>
    %18 = tpu.concatenate %17, %16 in 1 : vector<8x507xf32>, vector<8x5xf32> -> vector<8x512xf32>
    %cst_11 = arith.constant 0.000000e+00 : f32
    %19 = vector.broadcast %cst_11 : f32 to vector<8x6xf32>
    %20 = vector.extract_strided_slice %0 {offsets = [0, 6], sizes = [8, 506], strides = [1, 1]} : vector<8x512xf32> to vector<8x506xf32>
    %21 = tpu.concatenate %20, %19 in 1 : vector<8x506xf32>, vector<8x6xf32> -> vector<8x512xf32>
    %cst_12 = arith.constant 0.000000e+00 : f32
    %22 = vector.broadcast %cst_12 : f32 to vector<8x7xf32>
    %23 = vector.extract_strided_slice %0 {offsets = [0, 7], sizes = [8, 505], strides = [1, 1]} : vector<8x512xf32> to vector<8x505xf32>
    %24 = tpu.concatenate %23, %22 in 1 : vector<8x505xf32>, vector<8x7xf32> -> vector<8x512xf32>
    %cst_13 = arith.constant 0.000000e+00 : f32
    %25 = vector.broadcast %cst_13 : f32 to vector<8x8xf32>
    %26 = vector.extract_strided_slice %0 {offsets = [0, 8], sizes = [8, 504], strides = [1, 1]} : vector<8x512xf32> to vector<8x504xf32>
    %27 = tpu.concatenate %26, %25 in 1 : vector<8x504xf32>, vector<8x8xf32> -> vector<8x512xf32>
    %cst_14 = arith.constant 0.000000e+00 : f32
    %28 = vector.broadcast %cst_14 : f32 to vector<8x9xf32>
    %29 = vector.extract_strided_slice %0 {offsets = [0, 9], sizes = [8, 503], strides = [1, 1]} : vector<8x512xf32> to vector<8x503xf32>
    %30 = tpu.concatenate %29, %28 in 1 : vector<8x503xf32>, vector<8x9xf32> -> vector<8x512xf32>
    %31 = tpu.concatenate %0, %6, %9, %12, %15, %18, %21, %24, %27, %30 in 0 : vector<8x512xf32>, vector<8x512xf32>, vector<8x512xf32>, vector<8x512xf32>, vector<8x512xf32>, vector<8x512xf32>, vector<8x512xf32>, vector<8x512xf32>, vector<8x512xf32>, vector<8x512xf32> -> vector<80x512xf32>
    %cst_15 = arith.constant dense<0.000000e+00> : vector<8x512xf32>
    %32 = tpu.matmul %1, %31, %cst_15 {dimension_numbers = #tpu.dot_dimension_numbers<[1], [0], [0], [1], [0, 0, 1, 1], [], []>} : vector<8x80xf32>, vector<80x512xf32>, vector<8x512xf32> -> vector<8x512xf32>
    %33 = vector.broadcast %2 : vector<8x1xf32> to vector<8x512xf32>
    %34 = arith.addf %32, %33 : vector<8x512xf32>
    %35 = math.tanh %34 : vector<8x512xf32>
    %36 = tpu.iota {dimensions = array<i32: 1>} : vector<1x512xi32>
    %c128_i32 = arith.constant 128 : i32
    %c0_i32 = arith.constant 0 : i32
    %37 = arith.cmpi eq, %c128_i32, %c0_i32 : i32
    %c1_i32 = arith.constant 1 : i32
    %38 = arith.select %37, %c1_i32, %c128_i32 : i32
    %39 = vector.broadcast %38 : i32 to vector<1x512xi32>
    %40 = arith.remsi %36, %39 : vector<1x512xi32>
    %c0_i32_16 = arith.constant 0 : i32
    %41 = vector.broadcast %c0_i32_16 : i32 to vector<1x512xi32>
    %42 = arith.cmpi ne, %40, %41 : vector<1x512xi32>
    %c0_i32_17 = arith.constant 0 : i32
    %43 = vector.broadcast %c0_i32_17 : i32 to vector<1x512xi32>
    %44 = arith.cmpi slt, %40, %43 : vector<1x512xi32>
    %c0_i32_18 = arith.constant 0 : i32
    %45 = arith.cmpi slt, %38, %c0_i32_18 : i32
    %46 = vector.broadcast %45 : i1 to vector<1x512xi1>
    %47 = vector.broadcast %46 : vector<1x512xi1> to vector<1x512xi1>
    %48 = arith.xori %44, %47 : vector<1x512xi1>
    %49 = arith.andi %48, %42 : vector<1x512xi1>
    %50 = vector.broadcast %38 : i32 to vector<1x512xi32>
    %51 = arith.addi %40, %50 : vector<1x512xi32>
    %52 = arith.select %49, %51, %40 : vector<1x512xi1>, vector<1x512xi32>
    %c2_i32 = arith.constant 2 : i32
    %c0_i32_19 = arith.constant 0 : i32
    %53 = arith.cmpi eq, %c2_i32, %c0_i32_19 : i32
    %c1_i32_20 = arith.constant 1 : i32
    %54 = arith.select %53, %c1_i32_20, %c2_i32 : i32
    %55 = vector.broadcast %54 : i32 to vector<1x512xi32>
    %56 = arith.remsi %52, %55 : vector<1x512xi32>
    %c0_i32_21 = arith.constant 0 : i32
    %57 = vector.broadcast %c0_i32_21 : i32 to vector<1x512xi32>
    %58 = arith.cmpi ne, %56, %57 : vector<1x512xi32>
    %c0_i32_22 = arith.constant 0 : i32
    %59 = vector.broadcast %c0_i32_22 : i32 to vector<1x512xi32>
    %60 = arith.cmpi slt, %56, %59 : vector<1x512xi32>
    %c0_i32_23 = arith.constant 0 : i32
    %61 = arith.cmpi slt, %54, %c0_i32_23 : i32
    %62 = vector.broadcast %61 : i1 to vector<1x512xi1>
    %63 = vector.broadcast %62 : vector<1x512xi1> to vector<1x512xi1>
    %64 = arith.xori %60, %63 : vector<1x512xi1>
    %65 = arith.andi %64, %58 : vector<1x512xi1>
    %66 = vector.broadcast %54 : i32 to vector<1x512xi32>
    %67 = arith.addi %56, %66 : vector<1x512xi32>
    %68 = arith.select %65, %67, %56 : vector<1x512xi1>, vector<1x512xi32>
    %c0_i32_24 = arith.constant 0 : i32
    %69 = vector.broadcast %c0_i32_24 : i32 to vector<1x512xi32>
    %70 = arith.cmpi eq, %68, %69 : vector<1x512xi32>
    %c64_i32 = arith.constant 64 : i32
    %71 = vector.broadcast %c64_i32 : i32 to vector<1x512xi32>
    %72 = arith.cmpi slt, %52, %71 : vector<1x512xi32>
    %73 = arith.andi %70, %72 : vector<1x512xi1>
    %cst_25 = arith.constant 0.000000e+00 : f32
    %74 = vector.shape_cast %73 : vector<1x512xi1> to vector<1x512xi1>
    %75 = vector.broadcast %74 : vector<1x512xi1> to vector<8x512xi1>
    %76 = vector.broadcast %cst_25 : f32 to vector<8x512xf32>
    %77 = arith.select %75, %35, %76 : vector<8x512xi1>, vector<8x512xf32>
    %cst_26 = arith.constant 0.000000e+00 : f32
    %78 = vector.broadcast %cst_26 : f32 to vector<8x8xf32>
    %79 = vector.extract_strided_slice %77 {offsets = [0, 0], sizes = [8, 504], strides = [1, 1]} : vector<8x512xf32> to vector<8x504xf32>
    %80 = tpu.concatenate %78, %79 in 1 : vector<8x8xf32>, vector<8x504xf32> -> vector<8x512xf32>
    %cst_27 = arith.constant 0.000000e+00 : f32
    %81 = vector.broadcast %cst_27 : f32 to vector<8x6xf32>
    %82 = vector.extract_strided_slice %77 {offsets = [0, 0], sizes = [8, 506], strides = [1, 1]} : vector<8x512xf32> to vector<8x506xf32>
    %83 = tpu.concatenate %81, %82 in 1 : vector<8x6xf32>, vector<8x506xf32> -> vector<8x512xf32>
    %cst_28 = arith.constant 0.000000e+00 : f32
    %84 = vector.broadcast %cst_28 : f32 to vector<8x4xf32>
    %85 = vector.extract_strided_slice %77 {offsets = [0, 0], sizes = [8, 508], strides = [1, 1]} : vector<8x512xf32> to vector<8x508xf32>
    %86 = tpu.concatenate %84, %85 in 1 : vector<8x4xf32>, vector<8x508xf32> -> vector<8x512xf32>
    %cst_29 = arith.constant 0.000000e+00 : f32
    %87 = vector.broadcast %cst_29 : f32 to vector<8x2xf32>
    %88 = vector.extract_strided_slice %77 {offsets = [0, 0], sizes = [8, 510], strides = [1, 1]} : vector<8x512xf32> to vector<8x510xf32>
    %89 = tpu.concatenate %87, %88 in 1 : vector<8x2xf32>, vector<8x510xf32> -> vector<8x512xf32>
    %cst_30 = arith.constant 0.000000e+00 : f32
    %90 = vector.broadcast %cst_30 : f32 to vector<8x2xf32>
    %91 = vector.extract_strided_slice %77 {offsets = [0, 2], sizes = [8, 510], strides = [1, 1]} : vector<8x512xf32> to vector<8x510xf32>
    %92 = tpu.concatenate %91, %90 in 1 : vector<8x510xf32>, vector<8x2xf32> -> vector<8x512xf32>
    %cst_31 = arith.constant 0.000000e+00 : f32
    %93 = vector.broadcast %cst_31 : f32 to vector<8x4xf32>
    %94 = vector.extract_strided_slice %77 {offsets = [0, 4], sizes = [8, 508], strides = [1, 1]} : vector<8x512xf32> to vector<8x508xf32>
    %95 = tpu.concatenate %94, %93 in 1 : vector<8x508xf32>, vector<8x4xf32> -> vector<8x512xf32>
    %cst_32 = arith.constant 0.000000e+00 : f32
    %96 = vector.broadcast %cst_32 : f32 to vector<8x6xf32>
    %97 = vector.extract_strided_slice %77 {offsets = [0, 6], sizes = [8, 506], strides = [1, 1]} : vector<8x512xf32> to vector<8x506xf32>
    %98 = tpu.concatenate %97, %96 in 1 : vector<8x506xf32>, vector<8x6xf32> -> vector<8x512xf32>
    %cst_33 = arith.constant 0.000000e+00 : f32
    %99 = vector.broadcast %cst_33 : f32 to vector<8x8xf32>
    %100 = vector.extract_strided_slice %77 {offsets = [0, 8], sizes = [8, 504], strides = [1, 1]} : vector<8x512xf32> to vector<8x504xf32>
    %101 = tpu.concatenate %100, %99 in 1 : vector<8x504xf32>, vector<8x8xf32> -> vector<8x512xf32>
    %102 = tpu.concatenate %80, %83, %86, %89, %77, %92, %95, %98, %101 in 0 : vector<8x512xf32>, vector<8x512xf32>, vector<8x512xf32>, vector<8x512xf32>, vector<8x512xf32>, vector<8x512xf32>, vector<8x512xf32>, vector<8x512xf32>, vector<8x512xf32> -> vector<72x512xf32>
    %cst_34 = arith.constant dense<0.000000e+00> : vector<8x512xf32>
    %103 = tpu.matmul %3, %102, %cst_34 {dimension_numbers = #tpu.dot_dimension_numbers<[1], [0], [0], [1], [0, 0, 1, 1], [], []>} : vector<8x72xf32>, vector<72x512xf32>, vector<8x512xf32> -> vector<8x512xf32>
    %cst_35 = arith.constant 0.000000e+00 : f32
    %104 = vector.shape_cast %73 : vector<1x512xi1> to vector<1x512xi1>
    %105 = vector.broadcast %104 : vector<1x512xi1> to vector<8x512xi1>
    %106 = vector.broadcast %cst_35 : f32 to vector<8x512xf32>
    %107 = arith.select %105, %103, %106 : vector<8x512xi1>, vector<8x512xf32>
    %c0_36 = arith.constant 0 : index
    %c0_37 = arith.constant 0 : index
    %108 = vector.load %arg5[%c0_36, %c0_37] : memref<8x512xf32, #tpu.memory_space<vmem>>, vector<8x512xf32>
    tpu.vector_store %arg5[%c0_36, %c0_37], %107 {strides = array<i32>} : memref<8x512xf32, #tpu.memory_space<vmem>>, vector<8x512xf32>,
    return
  }
  func.func @transform_0(%arg0: i32) -> (i32, i32) {
    %c0_i32 = arith.constant 0 : i32
    %c0_i32_0 = arith.constant 0 : i32
    return %c0_i32, %arg0 : i32, i32
  }
  func.func @transform_1(%arg0: i32) -> (i32, i32) {
    %c0_i32 = arith.constant 0 : i32
    %c0_i32_0 = arith.constant 0 : i32
    %c0_i32_1 = arith.constant 0 : i32
    return %c0_i32, %c0_i32_0 : i32, i32
  }
  func.func @transform_2(%arg0: i32) -> (i32, i32) {
    %c0_i32 = arith.constant 0 : i32
    %c0_i32_0 = arith.constant 0 : i32
    %c0_i32_1 = arith.constant 0 : i32
    return %c0_i32, %c0_i32_0 : i32, i32
  }
  func.func @transform_3(%arg0: i32) -> (i32, i32) {
    %c0_i32 = arith.constant 0 : i32
    %c0_i32_0 = arith.constant 0 : i32
    %c0_i32_1 = arith.constant 0 : i32
    return %c0_i32, %c0_i32_0 : i32, i32
  }
  func.func @transform_4(%arg0: i32) -> (i32, i32) {
    %c0_i32 = arith.constant 0 : i32
    %c0_i32_0 = arith.constant 0 : i32
    return %c0_i32, %arg0 : i32, i32
  }
}

</mosaic_0001>

<llo_original>
// kernel: tpu_custom_call.1
$region0: #{tpu_custom_call.1}
  #allocation0 [shape = 'u32[]', space=smem, size = 0x4, offset = 0x4, fixed_abs, tag = 'smem constant byte address 0x4 - core index']
  #allocation1 [shape = 'u32[144,128]{1,0:T(1,128)}', space=vmem, size = 0x12000, scoped, tag = 'internal scratch']
  %s0 = inlined_call_operand.hbm [shape: f32[8,512], index: 0, kind: input, shape index: {}]
  %s1 = inlined_call_operand.vmem [shape: f32[8,80], index: 1, kind: input, shape index: {}]
  %s2 = inlined_call_operand.vmem [shape: f32[8,1], index: 2, kind: input, shape index: {}]
  %s3 = inlined_call_operand.vmem [shape: f32[8,72], index: 3, kind: input, shape index: {}]
  %s4 = inlined_call_operand.hbm [shape: f32[8,512], index: 4, kind: output, shape index: {}]
  %s5 = sld [smem:[#allocation0]]
  $region30: #{tpu_custom_call.1} parent=0
    _
  %s7 = ssub.s32 1, %s5
  %s8 = scalar_select 0, %s7, %s5
  $region1: #{tpu_custom_call.1} parent=0
    #allocation2 [shape = 'u8[16384]{0}', space=vmem, size = 0x4000, scoped, tag = 'input window, operand 0, single buffered']
    #allocation3 [shape = 's32[1]{0}', space=sflag, size = 0x4, scoped, tag = 'scoped memory for tpu_custom_call.1']
    #allocation4 [shape = 's32[1]{0}', space=sflag, size = 0x4, scoped, tag = 'scoped memory for tpu_custom_call.1']
    #allocation5 [shape = 'u8[16384]{0}', space=vmem, size = 0x4000, scoped, tag = 'output window, operand 0, single buffered']
    %9 = vsyncpa [#allocation3], 0
    %10 = vsyncpa [#allocation4], 0
    // Predicated region
    $region2: #{tpu_custom_call.1} parent=1 // pred_check
      _
    $region3: #{tpu_custom_call.1} parent=1 // pred_check_branch
      %12 = sbr.rel (0) target = $region5
    $region4: #{tpu_custom_call.1} parent=1 // pred_region
      %s14 = ssub.s32 512, 512
      %15 = vsyncadd [#allocation3], %s14
      %s17 = sshll.u32 [#allocation2], 4
      %s18 = int_to_ptr.vmem [resolvable:$true] %s17
      %20 = dma.hbm_to_vmem [thread:$0]  %s0, 512, %s18, [#allocation3]
    $region5: #{tpu_custom_call.1} parent=1 // pred_fallthru
      _
    // Predicated region
    $region6: #{tpu_custom_call.1} parent=1 // pred_check
      _
    $region7: #{tpu_custom_call.1} parent=1 // pred_check_branch
      %22 = sbr.rel (0) target = $region9
    $region8: #{tpu_custom_call.1} parent=1 // pred_region
      _
    $region9: #{tpu_custom_call.1} parent=1 // pred_fallthru
      _
    // Predicated region
    $region10: #{tpu_custom_call.1} parent=1 // pred_check
      _
    $region11: #{tpu_custom_call.1} parent=1 // pred_check_branch
      %24 = sbr.rel (0) target = $region13
    $region12: #{tpu_custom_call.1} parent=1 // pred_region
      _
    $region13: #{tpu_custom_call.1} parent=1 // pred_fallthru
      _
    // Predicated region
    $region14: #{tpu_custom_call.1} parent=1 // pred_check
      _
    $region15: #{tpu_custom_call.1} parent=1 // pred_check_branch
      %26 = sbr.rel (0) target = $region17
    $region16: #{tpu_custom_call.1} parent=1 // pred_region
      _
    $region17: #{tpu_custom_call.1} parent=1 // pred_fallthru
      _
    // Predicated region
    $region18: #{tpu_custom_call.1} parent=1 // pred_check
      _
    $region19: #{tpu_custom_call.1} parent=1 // pred_check_branch
      %28 = sbr.rel (0) target = $region21
    $region20: #{tpu_custom_call.1} parent=1 // pred_region
      %29 = dma.done [#allocation3], 512
    $region21: #{tpu_custom_call.1} parent=1 // pred_fallthru
      _
    %v30 = vld [vmem:[#allocation2] sm:$0xff]
    %v31 = vld [vmem:[#allocation2 + $0x8] sm:$0xff]
    %v32 = vld [vmem:[#allocation2 + $0x10] sm:$0xff]
    %v33 = vld [vmem:[#allocation2 + $0x18] sm:$0xff]
    %v34 = vld [vmem:[%s1] sm:$0xff]
    %v35 = vld [vmem:[%s2] sm:$0xff]
    %v36 = vld [vmem:[%s3] sm:$0xff]
    %41 = vrot.lane.b32.xlu0 %v30, 127
    %v42 = vpop.permute.xlu0 %41
    %43 = vrot.lane.b32.xlu0 %v31, 127
    %v44 = vpop.permute.xlu0 %43
    %45 = vrot.lane.b32.xlu0 %v32, 127
    %v46 = vpop.permute.xlu0 %45
    %47 = vrot.lane.b32.xlu0 %v33, 127
    %v48 = vpop.permute.xlu0 %47
    %vm49 = vcmask 1039360
    %v50 = vsel %vm49, %v42, %v44
    %v51 = vsel %vm49, %v44, %v46
    %v52 = vsel %vm49, %v46, %v48
    %v57 = vsel %vm49, %v48, 0.0
    %58 = vrot.lane.b32.xlu0 %v30, 126
    %v59 = vpop.permute.xlu0 %58
    %60 = vrot.lane.b32.xlu0 %v31, 126
    %v61 = vpop.permute.xlu0 %60
    %62 = vrot.lane.b32.xlu0 %v32, 126
    %v63 = vpop.permute.xlu0 %62
    %64 = vrot.lane.b32.xlu0 %v33, 126
    %v65 = vpop.permute.xlu0 %64
    %vm66 = vcmask 1031168
    %v67 = vsel %vm66, %v59, %v61
    %v68 = vsel %vm66, %v61, %v63
    %v69 = vsel %vm66, %v63, %v65
    %v74 = vsel %vm66, %v65, 0.0
    %75 = vrot.lane.b32.xlu0 %v30, 125
    %v76 = vpop.permute.xlu0 %75
    %77 = vrot.lane.b32.xlu0 %v31, 125
    %v78 = vpop.permute.xlu0 %77
    %79 = vrot.lane.b32.xlu0 %v32, 125
    %v80 = vpop.permute.xlu0 %79
    %81 = vrot.lane.b32.xlu0 %v33, 125
    %v82 = vpop.permute.xlu0 %81
    %vm83 = vcmask 1022976
    %v84 = vsel %vm83, %v76, %v78
    %v85 = vsel %vm83, %v78, %v80
    %v86 = vsel %vm83, %v80, %v82
    %v91 = vsel %vm83, %v82, 0.0
    %92 = vrot.lane.b32.xlu0 %v30, 124
    %v93 = vpop.permute.xlu0 %92
    %94 = vrot.lane.b32.xlu0 %v31, 124
    %v95 = vpop.permute.xlu0 %94
    %96 = vrot.lane.b32.xlu0 %v32, 124
    %v97 = vpop.permute.xlu0 %96
    %98 = vrot.lane.b32.xlu0 %v33, 124
    %v99 = vpop.permute.xlu0 %98
    %vm100 = vcmask 1014784
    %v101 = vsel %vm100, %v93, %v95
    %v102 = vsel %vm100, %v95, %v97
    %v103 = vsel %vm100, %v97, %v99
    %v108 = vsel %vm100, %v99, 0.0
    %109 = vrot.lane.b32.xlu0 %v30, 123
    %v110 = vpop.permute.xlu0 %109
    %111 = vrot.lane.b32.xlu0 %v31, 123
    %v112 = vpop.permute.xlu0 %111
    %113 = vrot.lane.b32.xlu0 %v32, 123
    %v114 = vpop.permute.xlu0 %113
    %115 = vrot.lane.b32.xlu0 %v33, 123
    %v116 = vpop.permute.xlu0 %115
    %vm117 = vcmask 1006592
    %v118 = vsel %vm117, %v110, %v112
    %v119 = vsel %vm117, %v112, %v114
    %v120 = vsel %vm117, %v114, %v116
    %v125 = vsel %vm117, %v116, 0.0
    %126 = vrot.lane.b32.xlu0 %v30, 122
    %v127 = vpop.permute.xlu0 %126
    %128 = vrot.lane.b32.xlu0 %v31, 122
    %v129 = vpop.permute.xlu0 %128
    %130 = vrot.lane.b32.xlu0 %v32, 122
    %v131 = vpop.permute.xlu0 %130
    %132 = vrot.lane.b32.xlu0 %v33, 122
    %v133 = vpop.permute.xlu0 %132
    %vm134 = vcmask 998400
    %v135 = vsel %vm134, %v127, %v129
    %v136 = vsel %vm134, %v129, %v131
    %v137 = vsel %vm134, %v131, %v133
    %v142 = vsel %vm134, %v133, 0.0
    %143 = vrot.lane.b32.xlu0 %v30, 121
    %v144 = vpop.permute.xlu0 %143
    %145 = vrot.lane.b32.xlu0 %v31, 121
    %v146 = vpop.permute.xlu0 %145
    %147 = vrot.lane.b32.xlu0 %v32, 121
    %v148 = vpop.permute.xlu0 %147
    %149 = vrot.lane.b32.xlu0 %v33, 121
    %v150 = vpop.permute.xlu0 %149
    %vm151 = vcmask 990208
    %v152 = vsel %vm151, %v144, %v146
    %v153 = vsel %vm151, %v146, %v148
    %v154 = vsel %vm151, %v148, %v150
    %v159 = vsel %vm151, %v150, 0.0
    %160 = vrot.lane.b32.xlu0 %v30, 120
    %v161 = vpop.permute.xlu0 %160
    %162 = vrot.lane.b32.xlu0 %v31, 120
    %v163 = vpop.permute.xlu0 %162
    %164 = vrot.lane.b32.xlu0 %v32, 120
    %v165 = vpop.permute.xlu0 %164
    %166 = vrot.lane.b32.xlu0 %v33, 120
    %v167 = vpop.permute.xlu0 %166
    %vm168 = vcmask 982016
    %v169 = vsel %vm168, %v161, %v163
    %v170 = vsel %vm168, %v163, %v165
    %v171 = vsel %vm168, %v165, %v167
    %v176 = vsel %vm168, %v167, 0.0
    %177 = vrot.lane.b32.xlu0 %v30, 119
    %v178 = vpop.permute.xlu0 %177
    %179 = vrot.lane.b32.xlu0 %v31, 119
    %v180 = vpop.permute.xlu0 %179
    %181 = vrot.lane.b32.xlu0 %v32, 119
    %v182 = vpop.permute.xlu0 %181
    %183 = vrot.lane.b32.xlu0 %v33, 119
    %v184 = vpop.permute.xlu0 %183
    %vm185 = vcmask 973824
    %v186 = vsel %vm185, %v178, %v180
    %v187 = vsel %vm185, %v180, %v182
    %v188 = vsel %vm185, %v182, %v184
    %v193 = vsel %vm185, %v184, 0.0
    %195 = vset.pattern.permute.xlu0 0
    %196 = vperm.xlu0 %195, %v35
    %v197 = vpop.permute.xlu0 %196
    %vm199 = vcmask 654336
    %v201 = vsel %vm199, %v34, 0
    %203 = vmatprep.subr.mxu0 %v31
    %204 = vmatpush1.msra.mxu0 %v30
    %205 = vmatprep.subr.mxu0 %v51
    %206 = vmatpush1.msra.mxu0 %v50
    %207 = vmatprep.subr.mxu0 %v68
    %208 = vmatpush1.msra.mxu0 %v67
    %209 = vmatprep.subr.mxu0 %v85
    %210 = vmatpush1.msra.mxu0 %v84
    %211 = vmatprep.subr.mxu0 %v102
    %212 = vmatpush1.msra.mxu0 %v101
    %213 = vmatprep.subr.mxu0 %v119
    %214 = vmatpush1.msra.mxu0 %v118
    %215 = vmatprep.subr.mxu0 %v136
    %216 = vmatpush1.msra.mxu0 %v135
    %217 = vmatprep.subr.mxu0 %v153
    %218 = vmatpush1.msra.mxu0 %v152
    %219 = vmatprep.subr.mxu0 %v170
    %220 = vmatpush1.msra.mxu0 %v169
    %221 = vmatprep.subr.mxu0 %v187
    %222 = vmatpush1.msra.mxu0 %v186
    %223 = vmatprep.subr.mxu0 0.0
    %224 = vmatpush1.msra.mxu0 0.0
    %225 = vmatprep.subr.mxu0 0.0
    %226 = vmatpush1.msra.mxu0 0.0
    %227 = vmatprep.subr.mxu0 0.0
    %228 = vmatpush1.msra.mxu0 0.0
    %229 = vmatprep.subr.mxu0 0.0
    %230 = vmatpush1.msra.mxu0 0.0
    %231 = vmatprep.subr.mxu0 0.0
    %232 = vmatpush1.msra.mxu0 0.0
    %233 = vmatprep.subr.mxu0 0.0
    %234 = vmatpush1.msra.mxu0 0.0
    %235 = vmatprep.subr.mxu0 0.0
    %236 = vmatpush1.msra.mxu0 0.0
    %237 = vmatprep.subr.mxu0 0.0
    %238 = vmatpush1.msra.mxu0 0.0
    %239 = vmatprep.subr.mxu0 0.0
    %240 = vmatpush1.msra.mxu0 0.0
    %241 = vmatprep.subr.mxu0 0.0
    %242 = vmatpush1.msra.mxu0 0.0
    %243 = vmatprep.subr.mxu0 0.0
    %244 = vmatpush1.msra.mxu0 0.0
    %245 = vmatprep.subr.mxu0 0.0
    %246 = vmatpush1.msra.mxu0 0.0
    %247 = vmatprep.subr.mxu0 0.0
    %248 = vmatpush1.msra.mxu0 0.0
    %249 = vmatprep.subr.mxu0 0.0
    %250 = vmatpush1.msra.mxu0 0.0
    %251 = vmatprep.subr.mxu0 0.0
    %252 = vmatpush1.msra.mxu0 0.0
    %253 = vmatprep.subr.mxu0 0.0
    %254 = vmatpush1.msra.mxu0 0.0
    %255 = vmatprep.subr.mxu0 0.0
    %256 = vmatpush1.msra.mxu0 0.0
    %257 = vmatprep.subr.mxu0 0.0
    %258 = vmatpush1.msra.mxu0 0.0
    %259 = vmatprep.subr.mxu0 0.0
    %260 = vmatpush1.msra.mxu0 0.0
    %261 = vmatprep.subr.mxu0 0.0
    %262 = vmatpush1.msra.mxu0 0.0
    %263 = vmatprep.subr.mxu0 0.0
    %264 = vmatpush1.msra.mxu0 0.0
    %265 = vmatprep.subr.mxu0 0.0
    %266 = vmatpush1.msra.mxu0 0.0
    %267 = vmatprep.mubr.f32.mxu0 0.0
    %268 = vmatmul.mubr.f32.gmra.mrb[0].mxu0 %v201
    %v269 = vpop.f32.mrb[0].mxu0
    %v270 = vadd.f32 %v197, %v269
    %v271 = vpop.f32.mrb[0].mxu0
    %v272 = vadd.f32 %v197, %v271
    %273 = vdwg.mxu0
    %274 = vmatprep.subr.mxu0 %v33
    %275 = vmatpush1.msra.mxu0 %v32
    %276 = vmatprep.subr.mxu0 %v57
    %277 = vmatpush1.msra.mxu0 %v52
    %278 = vmatprep.subr.mxu0 %v74
    %279 = vmatpush1.msra.mxu0 %v69
    %280 = vmatprep.subr.mxu0 %v91
    %281 = vmatpush1.msra.mxu0 %v86
    %282 = vmatprep.subr.mxu0 %v108
    %283 = vmatpush1.msra.mxu0 %v103
    %284 = vmatprep.subr.mxu0 %v125
    %285 = vmatpush1.msra.mxu0 %v120
    %286 = vmatprep.subr.mxu0 %v142
    %287 = vmatpush1.msra.mxu0 %v137
    %288 = vmatprep.subr.mxu0 %v159
    %289 = vmatpush1.msra.mxu0 %v154
    %290 = vmatprep.subr.mxu0 %v176
    %291 = vmatpush1.msra.mxu0 %v171
    %292 = vmatprep.subr.mxu0 %v193
    %293 = vmatpush1.msra.mxu0 %v188
    %294 = vmatprep.subr.mxu0 0.0
    %295 = vmatpush1.msra.mxu0 0.0
    %296 = vmatprep.subr.mxu0 0.0
    %297 = vmatpush1.msra.mxu0 0.0
    %298 = vmatprep.subr.mxu0 0.0
    %299 = vmatpush1.msra.mxu0 0.0
    %300 = vmatprep.subr.mxu0 0.0
    %301 = vmatpush1.msra.mxu0 0.0
    %302 = vmatprep.subr.mxu0 0.0
    %303 = vmatpush1.msra.mxu0 0.0
    %304 = vmatprep.subr.mxu0 0.0
    %305 = vmatpush1.msra.mxu0 0.0
    %306 = vmatprep.subr.mxu0 0.0
    %307 = vmatpush1.msra.mxu0 0.0
    %308 = vmatprep.subr.mxu0 0.0
    %309 = vmatpush1.msra.mxu0 0.0
    %310 = vmatprep.subr.mxu0 0.0
    %311 = vmatpush1.msra.mxu0 0.0
    %312 = vmatprep.subr.mxu0 0.0
    %313 = vmatpush1.msra.mxu0 0.0
    %314 = vmatprep.subr.mxu0 0.0
    %315 = vmatpush1.msra.mxu0 0.0
    %316 = vmatprep.subr.mxu0 0.0
    %317 = vmatpush1.msra.mxu0 0.0
    %318 = vmatprep.subr.mxu0 0.0
    %319 = vmatpush1.msra.mxu0 0.0
    %320 = vmatprep.subr.mxu0 0.0
    %321 = vmatpush1.msra.mxu0 0.0
    %322 = vmatprep.subr.mxu0 0.0
    %323 = vmatpush1.msra.mxu0 0.0
    %324 = vmatprep.subr.mxu0 0.0
    %325 = vmatpush1.msra.mxu0 0.0
    %326 = vmatprep.subr.mxu0 0.0
    %327 = vmatpush1.msra.mxu0 0.0
    %328 = vmatprep.subr.mxu0 0.0
    %329 = vmatpush1.msra.mxu0 0.0
    %330 = vmatprep.subr.mxu0 0.0
    %331 = vmatpush1.msra.mxu0 0.0
    %332 = vmatprep.subr.mxu0 0.0
    %333 = vmatpush1.msra.mxu0 0.0
    %334 = vmatprep.subr.mxu0 0.0
    %335 = vmatpush1.msra.mxu0 0.0
    %336 = vmatprep.subr.mxu0 0.0
    %337 = vmatpush1.msra.mxu0 0.0
    %338 = vmatprep.mubr.f32.mxu0 0.0
    %339 = vmatmul.mubr.f32.gmra.mrb[0].mxu0 %v201
    %v340 = vpop.f32.mrb[0].mxu0
    %v341 = vadd.f32 %v197, %v340
    %v342 = vpop.f32.mrb[0].mxu0
    %v343 = vadd.f32 %v197, %v342
    %344 = vdwg.mxu0
    %v345 = vtanh.pop %v270
    %v346 = vtanh.pop %v272
    %v347 = vtanh.pop %v341
    %v348 = vtanh.pop %v343
    %v349 = vlaneseq
    %v350 = vand.u32 %v349, 127
    %v351 = vadd.s32 %v350, 128
    %v352 = vadd.s32 %v350, 256
    %v353 = vadd.s32 %v350, 384
    %vm354 = vcmp.lt.s32.totalorder %v350, 0
    %v355 = vsub.s32 0, %v350
    %v356 = vsel %vm354, %v355, %v350
    %v357 = vshrl.u32 %v356, 7
    %v358 = vand.u32 %v356, 127
    %v359 = vsub.s32 0, %v358
    %v360 = vsel %vm354, %v359, %v358
    %vm361 = vcmp.lt.s32.totalorder %v351, 0
    %v362 = vsub.s32 0, %v351
    %v363 = vsel %vm361, %v362, %v351
    %v364 = vshrl.u32 %v363, 7
    %v365 = vand.u32 %v363, 127
    %v366 = vsub.s32 0, %v365
    %v367 = vsel %vm361, %v366, %v365
    %vm368 = vcmp.lt.s32.totalorder %v352, 0
    %v369 = vsub.s32 0, %v352
    %v370 = vsel %vm368, %v369, %v352
    %v371 = vshrl.u32 %v370, 7
    %v372 = vand.u32 %v370, 127
    %v373 = vsub.s32 0, %v372
    %v374 = vsel %vm368, %v373, %v372
    %vm375 = vcmp.lt.s32.totalorder %v353, 0
    %v376 = vsub.s32 0, %v353
    %v377 = vsel %vm375, %v376, %v353
    %v378 = vshrl.u32 %v377, 7
    %v379 = vand.u32 %v377, 127
    %v380 = vsub.s32 0, %v379
    %v381 = vsel %vm375, %v380, %v379
    %vm382 = vcmp.ne.s32.totalorder %v360, 0
    %vm383 = vcmp.ne.s32.totalorder %v367, 0
    %vm384 = vcmp.ne.s32.totalorder %v374, 0
    %vm385 = vcmp.ne.s32.totalorder %v381, 0
    %vm386 = vcmp.lt.s32.totalorder %v360, 0
    %vm387 = vcmp.lt.s32.totalorder %v367, 0
    %vm388 = vcmp.lt.s32.totalorder %v374, 0
    %vm389 = vcmp.lt.s32.totalorder %v381, 0
    %vm390 = vmand %vm386, %vm382
    %vm391 = vmand %vm387, %vm383
    %vm392 = vmand %vm388, %vm384
    %vm393 = vmand %vm389, %vm385
    %v394 = vadd.s32 %v360, 128
    %v395 = vadd.s32 %v367, 128
    %v396 = vadd.s32 %v374, 128
    %v397 = vadd.s32 %v381, 128
    %v398 = vsel %vm390, %v394, %v360
    %v399 = vsel %vm391, %v395, %v367
    %v400 = vsel %vm392, %v396, %v374
    %v401 = vsel %vm393, %v397, %v381
    %vm402 = vcmp.lt.s32.totalorder %v398, 0
    %v403 = vsub.s32 0, %v398
    %v404 = vsel %vm402, %v403, %v398
    %v405 = vshrl.u32 %v404, 1
    %v406 = vand.u32 %v404, 1
    %v407 = vsub.s32 0, %v406
    %v408 = vsel %vm402, %v407, %v406
    %vm409 = vcmp.lt.s32.totalorder %v399, 0
    %v410 = vsub.s32 0, %v399
    %v411 = vsel %vm409, %v410, %v399
    %v412 = vshrl.u32 %v411, 1
    %v413 = vand.u32 %v411, 1
    %v414 = vsub.s32 0, %v413
    %v415 = vsel %vm409, %v414, %v413
    %vm416 = vcmp.lt.s32.totalorder %v400, 0
    %v417 = vsub.s32 0, %v400
    %v418 = vsel %vm416, %v417, %v400
    %v419 = vshrl.u32 %v418, 1
    %v420 = vand.u32 %v418, 1
    %v421 = vsub.s32 0, %v420
    %v422 = vsel %vm416, %v421, %v420
    %vm423 = vcmp.lt.s32.totalorder %v401, 0
    %v424 = vsub.s32 0, %v401
    %v425 = vsel %vm423, %v424, %v401
    %v426 = vshrl.u32 %v425, 1
    %v427 = vand.u32 %v425, 1
    %v428 = vsub.s32 0, %v427
    %v429 = vsel %vm423, %v428, %v427
    %vm430 = vcmp.ne.s32.totalorder %v408, 0
    %vm431 = vcmp.ne.s32.totalorder %v415, 0
    %vm432 = vcmp.ne.s32.totalorder %v422, 0
    %vm433 = vcmp.ne.s32.totalorder %v429, 0
    %vm434 = vcmp.lt.s32.totalorder %v408, 0
    %vm435 = vcmp.lt.s32.totalorder %v415, 0
    %vm436 = vcmp.lt.s32.totalorder %v422, 0
    %vm437 = vcmp.lt.s32.totalorder %v429, 0
    %vm438 = vmand %vm434, %vm430
    %vm439 = vmand %vm435, %vm431
    %vm440 = vmand %vm436, %vm432
    %vm441 = vmand %vm437, %vm433
    %v442 = vadd.s32 %v408, 2
    %v443 = vadd.s32 %v415, 2
    %v444 = vadd.s32 %v422, 2
    %v445 = vadd.s32 %v429, 2
    %v446 = vsel %vm438, %v442, %v408
    %v447 = vsel %vm439, %v443, %v415
    %v448 = vsel %vm440, %v444, %v422
    %v449 = vsel %vm441, %v445, %v429
    %vm450 = vcmp.eq.s32.totalorder %v446, 0
    %vm451 = vcmp.eq.s32.totalorder %v447, 0
    %vm452 = vcmp.eq.s32.totalorder %v448, 0
    %vm453 = vcmp.eq.s32.totalorder %v449, 0
    %vm454 = vcmp.lt.s32.totalorder %v398, 64
    %vm455 = vcmp.lt.s32.totalorder %v399, 64
    %vm456 = vcmp.lt.s32.totalorder %v400, 64
    %vm457 = vcmp.lt.s32.totalorder %v401, 64
    %vm458 = vmand %vm450, %vm454
    %vm459 = vmand %vm451, %vm455
    %vm460 = vmand %vm452, %vm456
    %vm461 = vmand %vm453, %vm457
    %v462 = vsel %vm458, 1, 0
    %v463 = vsel %vm459, 1, 0
    %v464 = vsel %vm460, 1, 0
    %v465 = vsel %vm461, 1, 0
    %vm466 = vcmp.eq.s32.totalorder %v462, 1
    %vm467 = vcmp.eq.s32.totalorder %v463, 1
    %vm468 = vcmp.eq.s32.totalorder %v464, 1
    %vm469 = vcmp.eq.s32.totalorder %v465, 1
    %v470 = vsel %vm466, %v345, 0.0
    %v471 = vsel %vm467, %v346, 0.0
    %v472 = vsel %vm468, %v347, 0.0
    %v473 = vsel %vm469, %v348, 0.0
    %478 = vrot.lane.b32.xlu0 %v470, 8
    %v479 = vpop.permute.xlu0 %478
    %480 = vrot.lane.b32.xlu0 %v471, 8
    %v481 = vpop.permute.xlu0 %480
    %482 = vrot.lane.b32.xlu0 %v472, 8
    %v483 = vpop.permute.xlu0 %482
    %484 = vrot.lane.b32.xlu0 %v473, 8
    %v485 = vpop.permute.xlu0 %484
    %vm486 = vcmask 64512
    %v487 = vsel %vm486, %v479, %v481
    %v488 = vsel %vm486, %v481, %v483
    %v489 = vsel %vm486, %v483, %v485
    %v494 = vsel %vm486, 0.0, %v479
    %495 = vrot.lane.b32.xlu0 %v470, 6
    %v496 = vpop.permute.xlu0 %495
    %497 = vrot.lane.b32.xlu0 %v471, 6
    %v498 = vpop.permute.xlu0 %497
    %499 = vrot.lane.b32.xlu0 %v472, 6
    %v500 = vpop.permute.xlu0 %499
    %501 = vrot.lane.b32.xlu0 %v473, 6
    %v502 = vpop.permute.xlu0 %501
    %vm503 = vcmask 48128
    %v504 = vsel %vm503, %v496, %v498
    %v505 = vsel %vm503, %v498, %v500
    %v506 = vsel %vm503, %v500, %v502
    %v511 = vsel %vm503, 0.0, %v496
    %512 = vrot.lane.b32.xlu0 %v470, 4
    %v513 = vpop.permute.xlu0 %512
    %514 = vrot.lane.b32.xlu0 %v471, 4
    %v515 = vpop.permute.xlu0 %514
    %516 = vrot.lane.b32.xlu0 %v472, 4
    %v517 = vpop.permute.xlu0 %516
    %518 = vrot.lane.b32.xlu0 %v473, 4
    %v519 = vpop.permute.xlu0 %518
    %vm520 = vcmask 31744
    %v521 = vsel %vm520, %v513, %v515
    %v522 = vsel %vm520, %v515, %v517
    %v523 = vsel %vm520, %v517, %v519
    %v528 = vsel %vm520, 0.0, %v513
    %529 = vrot.lane.b32.xlu0 %v470, 2
    %v530 = vpop.permute.xlu0 %529
    %531 = vrot.lane.b32.xlu0 %v471, 2
    %v532 = vpop.permute.xlu0 %531
    %533 = vrot.lane.b32.xlu0 %v472, 2
    %v534 = vpop.permute.xlu0 %533
    %535 = vrot.lane.b32.xlu0 %v473, 2
    %v536 = vpop.permute.xlu0 %535
    %vm537 = vcmask 15360
    %v538 = vsel %vm537, %v530, %v532
    %v539 = vsel %vm537, %v532, %v534
    %v540 = vsel %vm537, %v534, %v536
    %v545 = vsel %vm537, 0.0, %v530
    %546 = vrot.lane.b32.xlu0 %v470, 126
    %v547 = vpop.permute.xlu0 %546
    %548 = vrot.lane.b32.xlu0 %v471, 126
    %v549 = vpop.permute.xlu0 %548
    %550 = vrot.lane.b32.xlu0 %v472, 126
    %v551 = vpop.permute.xlu0 %550
    %552 = vrot.lane.b32.xlu0 %v473, 126
    %v553 = vpop.permute.xlu0 %552
    %v554 = vsel %vm66, %v547, %v549
    %v555 = vsel %vm66, %v549, %v551
    %v556 = vsel %vm66, %v551, %v553
    %v561 = vsel %vm66, %v553, 0.0
    %562 = vrot.lane.b32.xlu0 %v470, 124
    %v563 = vpop.permute.xlu0 %562
    %564 = vrot.lane.b32.xlu0 %v471, 124
    %v565 = vpop.permute.xlu0 %564
    %566 = vrot.lane.b32.xlu0 %v472, 124
    %v567 = vpop.permute.xlu0 %566
    %568 = vrot.lane.b32.xlu0 %v473, 124
    %v569 = vpop.permute.xlu0 %568
    %v570 = vsel %vm100, %v563, %v565
    %v571 = vsel %vm100, %v565, %v567
    %v572 = vsel %vm100, %v567, %v569
    %v577 = vsel %vm100, %v569, 0.0
    %578 = vrot.lane.b32.xlu0 %v470, 122
    %v579 = vpop.permute.xlu0 %578
    %580 = vrot.lane.b32.xlu0 %v471, 122
    %v581 = vpop.permute.xlu0 %580
    %582 = vrot.lane.b32.xlu0 %v472, 122
    %v583 = vpop.permute.xlu0 %582
    %584 = vrot.lane.b32.xlu0 %v473, 122
    %v585 = vpop.permute.xlu0 %584
    %v586 = vsel %vm134, %v579, %v581
    %v587 = vsel %vm134, %v581, %v583
    %v588 = vsel %vm134, %v583, %v585
    %v593 = vsel %vm134, %v585, 0.0
    %594 = vrot.lane.b32.xlu0 %v470, 120
    %v595 = vpop.permute.xlu0 %594
    %596 = vrot.lane.b32.xlu0 %v471, 120
    %v597 = vpop.permute.xlu0 %596
    %598 = vrot.lane.b32.xlu0 %v472, 120
    %v599 = vpop.permute.xlu0 %598
    %600 = vrot.lane.b32.xlu0 %v473, 120
    %v601 = vpop.permute.xlu0 %600
    %v602 = vsel %vm168, %v595, %v597
    %v603 = vsel %vm168, %v597, %v599
    %v604 = vsel %vm168, %v599, %v601
    %v609 = vsel %vm168, %v601, 0.0
    %vm610 = vcmask 588800
    %v612 = vsel %vm610, %v36, 0
    %614 = vmatprep.subr.mxu0 %v487
    %615 = vmatpush1.msra.mxu0 %v494
    %616 = vmatprep.subr.mxu0 %v504
    %617 = vmatpush1.msra.mxu0 %v511
    %618 = vmatprep.subr.mxu0 %v521
    %619 = vmatpush1.msra.mxu0 %v528
    %620 = vmatprep.subr.mxu0 %v538
    %621 = vmatpush1.msra.mxu0 %v545
    %622 = vmatprep.subr.mxu0 %v471
    %623 = vmatpush1.msra.mxu0 %v470
    %624 = vmatprep.subr.mxu0 %v555
    %625 = vmatpush1.msra.mxu0 %v554
    %626 = vmatprep.subr.mxu0 %v571
    %627 = vmatpush1.msra.mxu0 %v570
    %628 = vmatprep.subr.mxu0 %v587
    %629 = vmatpush1.msra.mxu0 %v586
    %630 = vmatprep.subr.mxu0 %v603
    %631 = vmatpush1.msra.mxu0 %v602
    %632 = vmatprep.subr.mxu0 0.0
    %633 = vmatpush1.msra.mxu0 0.0
    %634 = vmatprep.subr.mxu0 0.0
    %635 = vmatpush1.msra.mxu0 0.0
    %636 = vmatprep.subr.mxu0 0.0
    %637 = vmatpush1.msra.mxu0 0.0
    %638 = vmatprep.subr.mxu0 0.0
    %639 = vmatpush1.msra.mxu0 0.0
    %640 = vmatprep.subr.mxu0 0.0
    %641 = vmatpush1.msra.mxu0 0.0
    %642 = vmatprep.subr.mxu0 0.0
    %643 = vmatpush1.msra.mxu0 0.0
    %644 = vmatprep.subr.mxu0 0.0
    %645 = vmatpush1.msra.mxu0 0.0
    %646 = vmatprep.subr.mxu0 0.0
    %647 = vmatpush1.msra.mxu0 0.0
    %648 = vmatprep.subr.mxu0 0.0
    %649 = vmatpush1.msra.mxu0 0.0
    %650 = vmatprep.subr.mxu0 0.0
    %651 = vmatpush1.msra.mxu0 0.0
    %652 = vmatprep.subr.mxu0 0.0
    %653 = vmatpush1.msra.mxu0 0.0
    %654 = vmatprep.subr.mxu0 0.0
    %655 = vmatpush1.msra.mxu0 0.0
    %656 = vmatprep.subr.mxu0 0.0
    %657 = vmatpush1.msra.mxu0 0.0
    %658 = vmatprep.subr.mxu0 0.0
    %659 = vmatpush1.msra.mxu0 0.0
    %660 = vmatprep.subr.mxu0 0.0
    %661 = vmatpush1.msra.mxu0 0.0
    %662 = vmatprep.subr.mxu0 0.0
    %663 = vmatpush1.msra.mxu0 0.0
    %664 = vmatprep.subr.mxu0 0.0
    %665 = vmatpush1.msra.mxu0 0.0
    %666 = vmatprep.subr.mxu0 0.0
    %667 = vmatpush1.msra.mxu0 0.0
    %668 = vmatprep.subr.mxu0 0.0
    %669 = vmatpush1.msra.mxu0 0.0
    %670 = vmatprep.subr.mxu0 0.0
    %671 = vmatpush1.msra.mxu0 0.0
    %672 = vmatprep.subr.mxu0 0.0
    %673 = vmatpush1.msra.mxu0 0.0
    %674 = vmatprep.subr.mxu0 0.0
    %675 = vmatpush1.msra.mxu0 0.0
    %676 = vmatprep.subr.mxu0 0.0
    %677 = vmatpush1.msra.mxu0 0.0
    %678 = vmatprep.mubr.f32.mxu0 0.0
    %679 = vmatmul.mubr.f32.gmra.mrb[0].mxu0 %v612
    %v680 = vpop.f32.mrb[0].mxu0
    %v681 = vadd.f32 0.0, %v680
    %v682 = vpop.f32.mrb[0].mxu0
    %v683 = vadd.f32 0.0, %v682
    %684 = vdwg.mxu0
    %685 = vmatprep.subr.mxu0 %v489
    %686 = vmatpush1.msra.mxu0 %v488
    %687 = vmatprep.subr.mxu0 %v506
    %688 = vmatpush1.msra.mxu0 %v505
    %689 = vmatprep.subr.mxu0 %v523
    %690 = vmatpush1.msra.mxu0 %v522
    %691 = vmatprep.subr.mxu0 %v540
    %692 = vmatpush1.msra.mxu0 %v539
    %693 = vmatprep.subr.mxu0 %v473
    %694 = vmatpush1.msra.mxu0 %v472
    %695 = vmatprep.subr.mxu0 %v561
    %696 = vmatpush1.msra.mxu0 %v556
    %697 = vmatprep.subr.mxu0 %v577
    %698 = vmatpush1.msra.mxu0 %v572
    %699 = vmatprep.subr.mxu0 %v593
    %700 = vmatpush1.msra.mxu0 %v588
    %701 = vmatprep.subr.mxu0 %v609
    %702 = vmatpush1.msra.mxu0 %v604
    %703 = vmatprep.subr.mxu0 0.0
    %704 = vmatpush1.msra.mxu0 0.0
    %705 = vmatprep.subr.mxu0 0.0
    %706 = vmatpush1.msra.mxu0 0.0
    %707 = vmatprep.subr.mxu0 0.0
    %708 = vmatpush1.msra.mxu0 0.0
    %709 = vmatprep.subr.mxu0 0.0
    %710 = vmatpush1.msra.mxu0 0.0
    %711 = vmatprep.subr.mxu0 0.0
    %712 = vmatpush1.msra.mxu0 0.0
    %713 = vmatprep.subr.mxu0 0.0
    %714 = vmatpush1.msra.mxu0 0.0
    %715 = vmatprep.subr.mxu0 0.0
    %716 = vmatpush1.msra.mxu0 0.0
    %717 = vmatprep.subr.mxu0 0.0
    %718 = vmatpush1.msra.mxu0 0.0
    %719 = vmatprep.subr.mxu0 0.0
    %720 = vmatpush1.msra.mxu0 0.0
    %721 = vmatprep.subr.mxu0 0.0
    %722 = vmatpush1.msra.mxu0 0.0
    %723 = vmatprep.subr.mxu0 0.0
    %724 = vmatpush1.msra.mxu0 0.0
    %725 = vmatprep.subr.mxu0 0.0
    %726 = vmatpush1.msra.mxu0 0.0
    %727 = vmatprep.subr.mxu0 0.0
    %728 = vmatpush1.msra.mxu0 0.0
    %729 = vmatprep.subr.mxu0 0.0
    %730 = vmatpush1.msra.mxu0 0.0
    %731 = vmatprep.subr.mxu0 0.0
    %732 = vmatpush1.msra.mxu0 0.0
    %733 = vmatprep.subr.mxu0 0.0
    %734 = vmatpush1.msra.mxu0 0.0
    %735 = vmatprep.subr.mxu0 0.0
    %736 = vmatpush1.msra.mxu0 0.0
    %737 = vmatprep.subr.mxu0 0.0
    %738 = vmatpush1.msra.mxu0 0.0
    %739 = vmatprep.subr.mxu0 0.0
    %740 = vmatpush1.msra.mxu0 0.0
    %741 = vmatprep.subr.mxu0 0.0
    %742 = vmatpush1.msra.mxu0 0.0
    %743 = vmatprep.subr.mxu0 0.0
    %744 = vmatpush1.msra.mxu0 0.0
    %745 = vmatprep.subr.mxu0 0.0
    %746 = vmatpush1.msra.mxu0 0.0
    %747 = vmatprep.subr.mxu0 0.0
    %748 = vmatpush1.msra.mxu0 0.0
    %749 = vmatprep.mubr.f32.mxu0 0.0
    %750 = vmatmul.mubr.f32.gmra.mrb[0].mxu0 %v612
    %v751 = vpop.f32.mrb[0].mxu0
    %v752 = vadd.f32 0.0, %v751
    %v753 = vpop.f32.mrb[0].mxu0
    %v754 = vadd.f32 0.0, %v753
    %755 = vdwg.mxu0
    %v756 = vsel %vm466, %v681, 0.0
    %v757 = vsel %vm467, %v683, 0.0
    %v758 = vsel %vm468, %v752, 0.0
    %v759 = vsel %vm469, %v754, 0.0
    %760 = vst [vmem:[#allocation5] sm:$0xff] %v756
    %761 = vst [vmem:[#allocation5 + $0x8] sm:$0xff] %v757
    %762 = vst [vmem:[#allocation5 + $0x10] sm:$0xff] %v758
    %763 = vst [vmem:[#allocation5 + $0x18] sm:$0xff] %v759
    // Predicated region
    $region22: #{tpu_custom_call.1} parent=1 // pred_check
      _
    $region23: #{tpu_custom_call.1} parent=1 // pred_check_branch
      %765 = sbr.rel (0) target = $region25
    $region24: #{tpu_custom_call.1} parent=1 // pred_region
      %s767 = ssub.s32 512, 512
      %768 = vsyncadd [#allocation4], %s767
      %s770 = sshll.u32 [#allocation5], 4
      %s771 = int_to_ptr.vmem [resolvable:$true] %s770
      %773 = dma.vmem_to_hbm [thread:$0]  %s771, 512, %s4, [#allocation4]
    $region25: #{tpu_custom_call.1} parent=1 // pred_fallthru
      _
    // Predicated region
    $region26: #{tpu_custom_call.1} parent=1 // pred_check
      _
    $region27: #{tpu_custom_call.1} parent=1 // pred_check_branch
      %775 = sbr.rel (0) target = $region29
    $region28: #{tpu_custom_call.1} parent=1 // pred_region
      %776 = dma.done [#allocation4], 512
    $region29: #{tpu_custom_call.1} parent=1 // pred_fallthru
      _
    %777 = vsyncpa [#allocation3], 1
    %778 = vsyncpa [#allocation4], 1

</llo_original>
